<compile_context>
chip_gen: v7x
topology: tpu7x:2x2x1
jax: 0.10.0
libtpu: 0.0.40
codegen_flags: <defaults>
</compile_context>

<pallas_src>
import jax
import jax.numpy as jnp
from jax.experimental import pallas as pl
from jax.experimental.pallas import tpu as pltpu

BN_EPS = 1e-5


def _round_up(n, m):
    return ((n + m - 1) // m) * m


def _sigmoid(x):
    # Exactly the logistic function; lowers to a single EUP tanh plus cheap
    # VPU mul/add instead of exp + divide.
    return 0.5 * (jnp.tanh(0.5 * x) + 1.0)


# --------------------------------------------------------------------------- #
# Kernel
# --------------------------------------------------------------------------- #
def decoder_kernel(x_ref, w1_ref, b1_ref, w2_ref, b2_ref, we_ref, b3_ref,
                   o_ref, docvec_ref):
    # Grid: (jc, i, jf). jc/jf tile the word-embedding N axis (jc is the
    # megacore-parallel coarse split), i tiles the batch.
    #   x_ref:      (TB, Din_p)    bf16 batch tile
    #   w1_ref:     (Din_p, H_p)   bf16, BN1 scale folded, single-buffered
    #   b1_ref:     (1, H_p)       f32 shift  (= (bias - mean)*scale + beta)
    #   w2_ref:     (H_p, Dout_p)  bf16, BN2 scale folded, single-buffered
    #   b2_ref:     (1, Dout_p)    f32 shift
    #   we_ref:     (Dout_p, TN)   bf16 word-embedding column tile (streamed)
    #   b3_ref:     (1, TN)        f32 shift tile
    #   o_ref:      (TB, TN)       output tile (lane-dense)
    #   docvec_ref: (TB, Dout_p)   bf16 scratch, valid for the current (jc, i)
    jf = pl.program_id(2)

    @pl.when(jf == 0)
    def _():
        # Linear1 (+folded BN1) -> sigmoid -> Linear2 (+folded BN2) -> sigmoid.
        h1 = jnp.dot(x_ref[...], w1_ref[...], preferred_element_type=jnp.float32)
        s1 = _sigmoid(h1 + b1_ref[...])
        h2 = jnp.dot(s1.astype(w2_ref.dtype), w2_ref[...],
                     preferred_element_type=jnp.float32)
        docvec_ref[...] = _sigmoid(h2 + b2_ref[...]).astype(docvec_ref.dtype)

    # docvec @ WE[:, column-tile] (+folded BN3) -> sigmoid.
    z = jnp.dot(docvec_ref[...], we_ref[...], preferred_element_type=jnp.float32)
    o_ref[...] = _sigmoid(z + b3_ref[...]).astype(o_ref.dtype)


# --------------------------------------------------------------------------- #
# Parameter construction / folding / packing
# --------------------------------------------------------------------------- #
def make_torch_like_params(key, input_dim, output_dim):
    """Raw parameters matching the PyTorch module layout (deterministic)."""
    hidden = input_dim * 4
    ks = jax.random.split(key, 20)

    # nn.Linear weights stored torch-style as (out_features, in_features).
    w1 = jax.random.normal(ks[0], (hidden, input_dim), jnp.float32) / jnp.sqrt(input_dim)
    b1 = 0.1 * jax.random.normal(ks[1], (hidden,), jnp.float32)
    w2 = jax.random.normal(ks[2], (output_dim, hidden), jnp.float32) / jnp.sqrt(hidden)
    b2 = 0.1 * jax.random.normal(ks[3], (output_dim,), jnp.float32)
    we = jax.random.normal(ks[4], (output_dim, output_dim), jnp.float32)

    def bn(kg, kb, km, kv, n):
        gamma = 1.0 + 0.1 * jax.random.normal(kg, (n,), jnp.float32)
        beta = 0.1 * jax.random.normal(kb, (n,), jnp.float32)
        mean = 0.05 * jax.random.normal(km, (n,), jnp.float32)
        var = 0.5 + jax.random.uniform(kv, (n,), jnp.float32)
        return gamma, beta, mean, var

    bn1 = bn(ks[5], ks[6], ks[7], ks[8], hidden)
    bn2 = bn(ks[9], ks[10], ks[11], ks[12], output_dim)
    bn3 = bn(ks[13], ks[14], ks[15], ks[16], output_dim)
    return dict(w1=w1, b1=b1, bn1=bn1, w2=w2, b2=b2, bn2=bn2, we=we, bn3=bn3)


def fold_params(p, eps=BN_EPS):
    """Fold (bias + eval-mode BatchNorm1d) into weight columns + a shift vector.

    y = BN(x @ W^T + b) = x @ (W^T * s) + ((b - mean) * s + beta),
    s = gamma / sqrt(var + eps).

    Note: the BN scale is folded in f32 BEFORE the bf16 cast; if running
    variances can be tiny (large scale) consider keeping the scale on the f32
    shift/activation side instead to avoid amplifying bf16 rounding.
    """
    def fold(w_t, bias, bn):
        gamma, beta, mean, var = bn
        s = gamma / jnp.sqrt(var + eps)
        w_scaled = w_t * s[None, :]                       # scale columns
        shift = ((bias - mean) * s + beta)[None, :]       # (1, F)
        return w_scaled, shift

    w1s, sh1 = fold(p["w1"].T, p["b1"], p["bn1"])         # (Din, H), (1, H)
    w2s, sh2 = fold(p["w2"].T, p["b2"], p["bn2"])         # (H, Dout), (1, Dout)
    wes, sh3 = fold(p["we"], jnp.zeros((p["we"].shape[1],), jnp.float32), p["bn3"])
    return (w1s, sh1, w2s, sh2, wes, sh3)


def pack_params(folded, weight_dtype=jnp.bfloat16, mxu_align=256):
    """Zero-pad feature dims to multiples of `mxu_align` and cast weights.

    mxu_align=256 keeps every MXU pass full-width on v6e/v7x (2x256x256 MXUs);
    use 128 on v5e (4x128x128 MXUs).
    """
    w1s, sh1, w2s, sh2, wes, sh3 = folded

    def pad2(a, rows, cols):
        return jnp.pad(a, ((0, rows - a.shape[0]), (0, cols - a.shape[1])))

    d_in, h = w1s.shape
    d_out = wes.shape[1]
    d_in_p, h_p, d_out_p = (_round_up(d, mxu_align) for d in (d_in, h, d_out))

    w1p = pad2(w1s, d_in_p, h_p).astype(weight_dtype)
    w2p = pad2(w2s, h_p, d_out_p).astype(weight_dtype)
    wep = pad2(wes, d_out_p, d_out_p).astype(weight_dtype)
    sh1p = pad2(sh1, 1, h_p)
    sh2p = pad2(sh2, 1, d_out_p)
    sh3p = pad2(sh3, 1, d_out_p)

    # Invariant that makes padding exact: padded activation columns evaluate to
    # sigmoid(0)=0.5 but multiply zero-padded weight ROWS downstream, so they
    # contribute nothing.  These rows must stay exactly zero.
    assert not bool(jnp.any(w2p[h:, :])), "W2 row padding must stay exactly zero"
    assert not bool(jnp.any(wep[d_out:, :])), "WE row padding must stay exactly zero"
    return (w1p, sh1p, w2p, sh2p, wep, sh3p)


# --------------------------------------------------------------------------- #
# Wrapper
# --------------------------------------------------------------------------- #
def _pick_tn(d_out_p, itemsize, gran, tn_max=1024, budget_bytes=16 << 20):
    """Largest WE column-tile width (multiple of gran, divides d_out_p,
    <= tn_max) whose double-buffered tile fits the DMA budget."""
    best = gran
    cand = gran
    while cand <= min(tn_max, d_out_p):
        if d_out_p % cand == 0 and 2 * d_out_p * cand * itemsize <= budget_bytes:
            best = cand
        cand += gran
    return best


def decoder_forward(x, packed, out_dim, *, max_tb=256, tn=None,
                    out_dtype=jnp.float32):
    w1, b1, w2, b2, we, b3 = packed
    B, d_in = x.shape
    d_in_p, h_p = w1.shape
    d_out_p = we.shape[1]
    assert d_in <= d_in_p and out_dim <= d_out_p

    # Batch tiling: multiple of 16 (bf16 sublane packing); split into >=2
    # blocks for big batches so megacore can also shard the batch axis.
    tb = min(_round_up(B, 16), max_tb)
    if B > 128 and _round_up(B, tb) // tb < 2:
        tb = _round_up((B + 1) // 2, 16)
    b_pad = _round_up(B, tb)
    n_i = b_pad // tb

    # Word-embedding N tiling: coarse (megacore-parallel) x fine (streamed).
    gran = 256 if d_out_p % 256 == 0 else 128
    if tn is None:
        tn = _pick_tn(d_out_p, we.dtype.itemsize, gran)
    assert d_out_p % tn == 0 and tn % 128 == 0
    nn = d_out_p // tn
    n_jc = 2 if (nn >= 2 and nn % 2 == 0) else 1   # one coarse block per TC
    n_jf = nn // n_jc

    # Pad the input and cast it to the weight dtype once (halves x DMA bytes).
    x_p = jnp.pad(x, ((0, b_pad - B), (0, d_in_p - d_in))).astype(w1.dtype)

    nbytes = lambda a: a.size * a.dtype.itemsize
    out_itemsize = jnp.dtype(out_dtype).itemsize

    # Scoped-VMEM budget: actual resident set + 25% headroom (floor 8 MiB).
    resident = (
        nbytes(w1) + nbytes(b1) + nbytes(w2) + nbytes(b2)                   # x1 buffer
        + 2 * (d_out_p * tn * we.dtype.itemsize + tn * b3.dtype.itemsize)   # WE/b3 x2
        + 2 * tb * d_in_p * x_p.dtype.itemsize                              # x tile x2
        + 2 * tb * tn * out_itemsize                                        # out tile x2
        + tb * d_out_p * we.dtype.itemsize                                  # docvec scratch
        + 8 * tb * max(h_p, d_out_p, tn) * 4                                # f32 temporaries
    )
    vmem_limit = min(max(int(resident * 1.25), 8 << 20), 100 << 20)

    flops = int(2 * b_pad * n_jc * (d_in_p * h_p + h_p * d_out_p)
                + 2 * b_pad * d_out_p * d_out_p)
    transcendentals = int(b_pad * n_jc * (h_p + d_out_p) + b_pad * d_out_p)
    bytes_accessed = int(nbytes(x_p) + nbytes(w1) + nbytes(b1) + nbytes(w2)
                         + nbytes(b2) + n_i * (nbytes(we) + nbytes(b3))
                         + b_pad * d_out_p * out_itemsize)

    const = dict(pipeline_mode=pl.Buffered(1))      # grid-invariant -> 1 buffer
    n_block = lambda jc, i, jf: (0, jc * n_jf + jf)

    out = pl.pallas_call(
        decoder_kernel,
        out_shape=jax.ShapeDtypeStruct((b_pad, d_out_p), out_dtype),
        grid=(n_jc, n_i, n_jf),
        in_specs=[
            pl.BlockSpec((tb, d_in_p), lambda jc, i, jf: (i, 0)),             # x tile
            pl.BlockSpec((d_in_p, h_p), lambda jc, i, jf: (0, 0), **const),   # W1
            pl.BlockSpec((1, h_p), lambda jc, i, jf: (0, 0), **const),        # shift1
            pl.BlockSpec((h_p, d_out_p), lambda jc, i, jf: (0, 0), **const),  # W2
            pl.BlockSpec((1, d_out_p), lambda jc, i, jf: (0, 0), **const),    # shift2
            pl.BlockSpec((d_out_p, tn), n_block),                             # WE col tile
            pl.BlockSpec((1, tn), n_block),                                   # shift3 tile
        ],
        out_specs=pl.BlockSpec((tb, tn), lambda jc, i, jf: (i, jc * n_jf + jf)),
        scratch_shapes=[pltpu.VMEM((tb, d_out_p), we.dtype)],                 # docvec
        compiler_params=pltpu.CompilerParams(
            dimension_semantics=("parallel", "parallel", "arbitrary"),
            vmem_limit_bytes=vmem_limit),
        cost_estimate=pl.CostEstimate(
            flops=flops, transcendentals=transcendentals,
            bytes_accessed=bytes_accessed),
    )(x_p, w1, b1, w2, b2, we, b3)

    # Strip batch padding and the lane padding of the output features.
    return out[:B, :out_dim]


# --------------------------------------------------------------------------- #
# Pure-JAX references
# --------------------------------------------------------------------------- #
def decoder_forward_ref(x, folded, weight_dtype=jnp.bfloat16):
    """Reference with the same numerics path (bf16 weights/activations feeding
    the MXU, f32 accumulation and f32 bias-add/sigmoid)."""
    w1s, b1, w2s, b2, wes, b3 = folded
    w1c, w2c, wec = (w.astype(weight_dtype) for w in (w1s, w2s, wes))
    h1 = jnp.dot(x.astype(weight_dtype), w1c, preferred_element_type=jnp.float32) + b1
    s1 = jax.nn.sigmoid(h1)
    h2 = jnp.dot(s1.astype(weight_dtype), w2c, preferred_element_type=jnp.float32) + b2
    docvec = jax.nn.sigmoid(h2)
    z = jnp.dot(docvec.astype(weight_dtype), wec, preferred_element_type=jnp.float32) + b3
    return jax.nn.sigmoid(z)


def decoder_forward_ref_f32(x, folded):
    """Full-f32 reference (loose sanity check on the bf16 weight storage)."""
    w1s, b1, w2s, b2, wes, b3 = folded
    s1 = jax.nn.sigmoid(x @ w1s + b1)
    docvec = jax.nn.sigmoid(s1 @ w2s + b2)
    return jax.nn.sigmoid(docvec @ wes + b3)


# --------------------------------------------------------------------------- #
# Test
# --------------------------------------------------------------------------- #
def _check(key, input_dim, output_dim, batch, **fwd_kwargs):
    kx, kp = jax.random.split(key)
    x = jax.random.normal(kx, (batch, input_dim), jnp.float32)

    raw = make_torch_like_params(kp, input_dim, output_dim)
    folded = fold_params(raw)
    packed = pack_params(folded, weight_dtype=jnp.bfloat16)

    out = jax.block_until_ready(decoder_forward(x, packed, output_dim, **fwd_kwargs))
    ref_bf16 = decoder_forward_ref(x, folded)
    ref_f32 = decoder_forward_ref_f32(x, folded)

    assert out.shape == (batch, output_dim)
    assert jnp.allclose(out, ref_bf16, rtol=1e-2, atol=1e-2), "mismatch vs bf16 ref"
    assert jnp.allclose(out, ref_f32, rtol=5e-2, atol=5e-2), "mismatch vs f32 ref"


if __name__ == "__main__":
    key = jax.random.PRNGKey(0)
    k1, k2 = jax.random.split(key)

    # Toy case (decoder hidden=128, output=64): single grid block (1, 1, 1).
    _check(k1, input_dim=32, output_dim=64, batch=16)

    # Exercise WE N-streaming, the megacore-parallel coarse N split, multiple
    # batch tiles and ragged batch/feature padding: grid (2, 3, 1) with tn=128.
    _check(k2, input_dim=24, output_dim=72, batch=40, tn=128, max_tb=16)

    print("KERNEL_OK")
</pallas_src>

<mosaic_0001>
module attributes {stable_mosaic.version = 11 : i64} {
  func.func @decoder_kernel(%arg0: i32, %arg1: i32, %arg2: i32, %arg3: memref<16x256xbf16, #tpu.memory_space<vmem>>, %arg4: memref<256x256xbf16, #tpu.memory_space<vmem>>, %arg5: memref<1x256xf32, #tpu.memory_space<vmem>>, %arg6: memref<256x256xbf16, #tpu.memory_space<vmem>>, %arg7: memref<1x256xf32, #tpu.memory_space<vmem>>, %arg8: memref<256x256xbf16, #tpu.memory_space<vmem>>, %arg9: memref<1x256xf32, #tpu.memory_space<vmem>>, %arg10: memref<16x256xf32, #tpu.memory_space<vmem>>, %arg11: memref<16x256xbf16, #tpu.memory_space<vmem>>) attributes {dimension_semantics = [#tpu.dimension_semantics<parallel>, #tpu.dimension_semantics<parallel>, #tpu.dimension_semantics<arbitrary>], iteration_bounds = array<i64: 1, 1, 1>, scalar_prefetch = 0 : i64, scratch_operands = 1 : i64, tpu.core_type = #tpu.core_type<tc>, window_params = [{transform_indices = @transform_0, window_bounds = array<i64: 16, 256>}, {pipeline_mode = #tpu.pipeline_mode<synchronous>, transform_indices = @transform_1, window_bounds = array<i64: 256, 256>}, {pipeline_mode = #tpu.pipeline_mode<synchronous>, transform_indices = @transform_2, window_bounds = array<i64: 1, 256>}, {pipeline_mode = #tpu.pipeline_mode<synchronous>, transform_indices = @transform_3, window_bounds = array<i64: 256, 256>}, {pipeline_mode = #tpu.pipeline_mode<synchronous>, transform_indices = @transform_4, window_bounds = array<i64: 1, 256>}, {transform_indices = @transform_5, window_bounds = array<i64: 256, 256>}, {transform_indices = @transform_6, window_bounds = array<i64: 1, 256>}, {transform_indices = @transform_7, window_bounds = array<i64: 16, 256>}]} {
    %c0_i32 = arith.constant 0 : i32
    %0 = arith.cmpi eq, %arg2, %c0_i32 : i32
    %1 = arith.extui %0 : i1 to i32
    %c0_i32_0 = arith.constant 0 : i32
    %2 = arith.cmpi ne, %1, %c0_i32_0 : i32
    scf.if %2 {
      %c0_11 = arith.constant 0 : index
      %c0_12 = arith.constant 0 : index
      %17 = vector.load %arg3[%c0_11, %c0_12] : memref<16x256xbf16, #tpu.memory_space<vmem>>, vector<16x256xbf16>
      %c0_13 = arith.constant 0 : index
      %c0_14 = arith.constant 0 : index
      %18 = vector.load %arg4[%c0_13, %c0_14] : memref<256x256xbf16, #tpu.memory_space<vmem>>, vector<256x256xbf16>
      %cst_15 = arith.constant dense<0.000000e+00> : vector<16x256xf32>
      %19 = tpu.matmul %17, %18, %cst_15 {dimension_numbers = #tpu.dot_dimension_numbers<[1], [0], [0], [1], [0, 0, 1, 1], [], []>} : vector<16x256xbf16>, vector<256x256xbf16>, vector<16x256xf32> -> vector<16x256xf32>
      %c0_16 = arith.constant 0 : index
      %c0_17 = arith.constant 0 : index
      %20 = vector.load %arg5[%c0_16, %c0_17] : memref<1x256xf32, #tpu.memory_space<vmem>>, vector<1x256xf32>
      %21 = vector.broadcast %20 : vector<1x256xf32> to vector<16x256xf32>
      %22 = arith.addf %19, %21 : vector<16x256xf32>
      %cst_18 = arith.constant 5.000000e-01 : f32
      %23 = vector.broadcast %cst_18 : f32 to vector<16x256xf32>
      %24 = arith.mulf %23, %22 : vector<16x256xf32>
      %25 = math.tanh %24 : vector<16x256xf32>
      %cst_19 = arith.constant 1.000000e+00 : f32
      %26 = vector.broadcast %cst_19 : f32 to vector<16x256xf32>
      %27 = arith.addf %25, %26 : vector<16x256xf32>
      %cst_20 = arith.constant 5.000000e-01 : f32
      %28 = vector.broadcast %cst_20 : f32 to vector<16x256xf32>
      %29 = arith.mulf %28, %27 : vector<16x256xf32>
      %30 = arith.truncf %29 : vector<16x256xf32> to vector<16x256xbf16>
      %c0_21 = arith.constant 0 : index
      %c0_22 = arith.constant 0 : index
      %31 = vector.load %arg6[%c0_21, %c0_22] : memref<256x256xbf16, #tpu.memory_space<vmem>>, vector<256x256xbf16>
      %cst_23 = arith.constant dense<0.000000e+00> : vector<16x256xf32>
      %32 = tpu.matmul %30, %31, %cst_23 {dimension_numbers = #tpu.dot_dimension_numbers<[1], [0], [0], [1], [0, 0, 1, 1], [], []>} : vector<16x256xbf16>, vector<256x256xbf16>, vector<16x256xf32> -> vector<16x256xf32>
      %c0_24 = arith.constant 0 : index
      %c0_25 = arith.constant 0 : index
      %33 = vector.load %arg7[%c0_24, %c0_25] : memref<1x256xf32, #tpu.memory_space<vmem>>, vector<1x256xf32>
      %34 = vector.broadcast %33 : vector<1x256xf32> to vector<16x256xf32>
      %35 = arith.addf %32, %34 : vector<16x256xf32>
      %cst_26 = arith.constant 5.000000e-01 : f32
      %36 = vector.broadcast %cst_26 : f32 to vector<16x256xf32>
      %37 = arith.mulf %36, %35 : vector<16x256xf32>
      %38 = math.tanh %37 : vector<16x256xf32>
      %cst_27 = arith.constant 1.000000e+00 : f32
      %39 = vector.broadcast %cst_27 : f32 to vector<16x256xf32>
      %40 = arith.addf %38, %39 : vector<16x256xf32>
      %cst_28 = arith.constant 5.000000e-01 : f32
      %41 = vector.broadcast %cst_28 : f32 to vector<16x256xf32>
      %42 = arith.mulf %41, %40 : vector<16x256xf32>
      %43 = arith.truncf %42 : vector<16x256xf32> to vector<16x256xbf16>
      %c0_29 = arith.constant 0 : index
      %c0_30 = arith.constant 0 : index
      %44 = vector.load %arg11[%c0_29, %c0_30] : memref<16x256xbf16, #tpu.memory_space<vmem>>, vector<16x256xbf16>
      tpu.vector_store %arg11[%c0_29, %c0_30], %43 {strides = array<i32>} : memref<16x256xbf16, #tpu.memory_space<vmem>>, vector<16x256xbf16>,
    } else {
    }
    %c0 = arith.constant 0 : index
    %c0_1 = arith.constant 0 : index
    %3 = vector.load %arg11[%c0, %c0_1] : memref<16x256xbf16, #tpu.memory_space<vmem>>, vector<16x256xbf16>
    %c0_2 = arith.constant 0 : index
    %c0_3 = arith.constant 0 : index
    %4 = vector.load %arg8[%c0_2, %c0_3] : memref<256x256xbf16, #tpu.memory_space<vmem>>, vector<256x256xbf16>
    %cst = arith.constant dense<0.000000e+00> : vector<16x256xf32>
    %5 = tpu.matmul %3, %4, %cst {dimension_numbers = #tpu.dot_dimension_numbers<[1], [0], [0], [1], [0, 0, 1, 1], [], []>} : vector<16x256xbf16>, vector<256x256xbf16>, vector<16x256xf32> -> vector<16x256xf32>
    %c0_4 = arith.constant 0 : index
    %c0_5 = arith.constant 0 : index
    %6 = vector.load %arg9[%c0_4, %c0_5] : memref<1x256xf32, #tpu.memory_space<vmem>>, vector<1x256xf32>
    %7 = vector.broadcast %6 : vector<1x256xf32> to vector<16x256xf32>
    %8 = arith.addf %5, %7 : vector<16x256xf32>
    %cst_6 = arith.constant 5.000000e-01 : f32
    %9 = vector.broadcast %cst_6 : f32 to vector<16x256xf32>
    %10 = arith.mulf %9, %8 : vector<16x256xf32>
    %11 = math.tanh %10 : vector<16x256xf32>
    %cst_7 = arith.constant 1.000000e+00 : f32
    %12 = vector.broadcast %cst_7 : f32 to vector<16x256xf32>
    %13 = arith.addf %11, %12 : vector<16x256xf32>
    %cst_8 = arith.constant 5.000000e-01 : f32
    %14 = vector.broadcast %cst_8 : f32 to vector<16x256xf32>
    %15 = arith.mulf %14, %13 : vector<16x256xf32>
    %c0_9 = arith.constant 0 : index
    %c0_10 = arith.constant 0 : index
    %16 = vector.load %arg10[%c0_9, %c0_10] : memref<16x256xf32, #tpu.memory_space<vmem>>, vector<16x256xf32>
    tpu.vector_store %arg10[%c0_9, %c0_10], %15 {strides = array<i32>} : memref<16x256xf32, #tpu.memory_space<vmem>>, vector<16x256xf32>,
    return
  }
  func.func @transform_0(%arg0: i32, %arg1: i32, %arg2: i32) -> (i32, i32) {
    %c0_i32 = arith.constant 0 : i32
    %c0_i32_0 = arith.constant 0 : i32
    return %arg1, %c0_i32 : i32, i32
  }
  func.func @transform_1(%arg0: i32, %arg1: i32, %arg2: i32) -> (i32, i32) {
    %c0_i32 = arith.constant 0 : i32
    %c0_i32_0 = arith.constant 0 : i32
    %c0_i32_1 = arith.constant 0 : i32
    return %c0_i32, %c0_i32_0 : i32, i32
  }
  func.func @transform_2(%arg0: i32, %arg1: i32, %arg2: i32) -> (i32, i32) {
    %c0_i32 = arith.constant 0 : i32
    %c0_i32_0 = arith.constant 0 : i32
    %c0_i32_1 = arith.constant 0 : i32
    return %c0_i32, %c0_i32_0 : i32, i32
  }
  func.func @transform_3(%arg0: i32, %arg1: i32, %arg2: i32) -> (i32, i32) {
    %c0_i32 = arith.constant 0 : i32
    %c0_i32_0 = arith.constant 0 : i32
    %c0_i32_1 = arith.constant 0 : i32
    return %c0_i32, %c0_i32_0 : i32, i32
  }
  func.func @transform_4(%arg0: i32, %arg1: i32, %arg2: i32) -> (i32, i32) {
    %c0_i32 = arith.constant 0 : i32
    %c0_i32_0 = arith.constant 0 : i32
    %c0_i32_1 = arith.constant 0 : i32
    return %c0_i32, %c0_i32_0 : i32, i32
  }
  func.func @transform_5(%arg0: i32, %arg1: i32, %arg2: i32) -> (i32, i32) {
    %c1_i32 = arith.constant 1 : i32
    %0 = arith.muli %arg0, %c1_i32 : i32
    %1 = arith.addi %0, %arg2 : i32
    %c0_i32 = arith.constant 0 : i32
    %c0_i32_0 = arith.constant 0 : i32
    return %c0_i32, %1 : i32, i32
  }
  func.func @transform_6(%arg0: i32, %arg1: i32, %arg2: i32) -> (i32, i32) {
    %c1_i32 = arith.constant 1 : i32
    %0 = arith.muli %arg0, %c1_i32 : i32
    %1 = arith.addi %0, %arg2 : i32
    %c0_i32 = arith.constant 0 : i32
    %c0_i32_0 = arith.constant 0 : i32
    return %c0_i32, %1 : i32, i32
  }
  func.func @transform_7(%arg0: i32, %arg1: i32, %arg2: i32) -> (i32, i32) {
    %c1_i32 = arith.constant 1 : i32
    %0 = arith.muli %arg0, %c1_i32 : i32
    %1 = arith.addi %0, %arg2 : i32
    %c0_i32 = arith.constant 0 : i32
    return %arg1, %1 : i32, i32
  }
}

</mosaic_0001>

<llo_original>
// kernel: tpu_custom_call.1
$region0: #{tpu_custom_call.1}
  #allocation0 [shape = 'u32[]', space=smem, size = 0x4, offset = 0x4, fixed_abs, tag = 'smem constant byte address 0x4 - core index']
  #allocation1 [shape = 'u32[144,128]{1,0:T(1,128)}', space=vmem, size = 0x12000, scoped, tag = 'internal scratch']
  #allocation2 [shape = 'bf16[16,256]{1,0:T(16,128)(2,1)}', space=vmem, size = 0x2000, scoped, tag = 'scratch operand']
  %s0 = inlined_call_operand.hbm [shape: bf16[16,256], index: 0, kind: input, shape index: {}]
  %s1 = inlined_call_operand.hbm [shape: bf16[256,256], index: 1, kind: input, shape index: {}]
  %s2 = inlined_call_operand.vmem [shape: f32[1,256], index: 2, kind: input, shape index: {}]
  %s3 = inlined_call_operand.hbm [shape: bf16[256,256], index: 3, kind: input, shape index: {}]
  %s4 = inlined_call_operand.vmem [shape: f32[1,256], index: 4, kind: input, shape index: {}]
  %s5 = inlined_call_operand.hbm [shape: bf16[256,256], index: 5, kind: input, shape index: {}]
  %s6 = inlined_call_operand.vmem [shape: f32[1,256], index: 6, kind: input, shape index: {}]
  %s7 = inlined_call_operand.hbm [shape: f32[16,256], index: 7, kind: output, shape index: {}]
  %s8 = sld [smem:[#allocation0]]
  $region58: #{tpu_custom_call.1} parent=0
    _
  %s10 = ssub.s32 1, %s8
  %s11 = scalar_select 0, %s10, %s8
  $region1: #{tpu_custom_call.1} parent=0
    #allocation3 [shape = 'u8[8192]{0}', space=vmem, size = 0x2000, scoped, tag = 'input window, operand 0, single buffered']
    #allocation4 [shape = 's32[1]{0}', space=sflag, size = 0x4, scoped, tag = 'scoped memory for tpu_custom_call.1']
    #allocation5 [shape = 's32[1]{0}', space=sflag, size = 0x4, scoped, tag = 'scoped memory for tpu_custom_call.1']
    #allocation6 [shape = 'u8[131072]{0}', space=vmem, size = 0x20000, scoped, tag = 'input window, operand 1, single buffered']
    #allocation7 [shape = 's32[1]{0}', space=sflag, size = 0x4, scoped, tag = 'scoped memory for tpu_custom_call.1']
    #allocation8 [shape = 'u8[131072]{0}', space=vmem, size = 0x20000, scoped, tag = 'input window, operand 3, single buffered']
    #allocation9 [shape = 'u8[131072]{0}', space=vmem, size = 0x20000, scoped, tag = 'input window, operand 5, single buffered']
    #allocation10 [shape = 's32[1]{0}', space=sflag, size = 0x4, scoped, tag = 'scoped memory for tpu_custom_call.1']
    #allocation11 [shape = 'u8[16384]{0}', space=vmem, size = 0x4000, scoped, tag = 'output window, operand 0, single buffered']
    %12 = vsyncpa [#allocation4], 0
    %13 = vsyncpa [#allocation7], 0
    %14 = vsyncpa [#allocation10], 0
    %15 = vsyncpa [#allocation5], 0
    // Predicated region
    $region2: #{tpu_custom_call.1} parent=1 // pred_check
      _
    $region3: #{tpu_custom_call.1} parent=1 // pred_check_branch
      %17 = sbr.rel (0) target = $region5
    $region4: #{tpu_custom_call.1} parent=1 // pred_region
      %s19 = ssub.s32 256, 256
      %20 = vsyncadd [#allocation4], %s19
      %s21 = sshll.u32 [#allocation3], 4
      %s22 = int_to_ptr.vmem [resolvable:$true] %s21
      %27 = dma.hbm_to_vmem [thread:$0]  %s0, 256, %s22, [#allocation4], 128, 128, 8
    $region5: #{tpu_custom_call.1} parent=1 // pred_fallthru
      _
    // Predicated region
    $region6: #{tpu_custom_call.1} parent=1 // pred_check
      _
    $region7: #{tpu_custom_call.1} parent=1 // pred_check_branch
      %29 = sbr.rel (0) target = $region9
    $region8: #{tpu_custom_call.1} parent=1 // pred_region
      %s31 = ssub.s32 4096, 4096
      %32 = vsyncadd [#allocation7], %s31
      %s33 = sshll.u32 [#allocation6], 4
      %s34 = int_to_ptr.vmem [resolvable:$true] %s33
      %39 = dma.hbm_to_vmem [thread:$0]  %s1, 4096, %s34, [#allocation7], 128, 128, 8
    $region9: #{tpu_custom_call.1} parent=1 // pred_fallthru
      _
    // Predicated region
    $region10: #{tpu_custom_call.1} parent=1 // pred_check
      _
    $region11: #{tpu_custom_call.1} parent=1 // pred_check_branch
      %41 = sbr.rel (0) target = $region13
    $region12: #{tpu_custom_call.1} parent=1 // pred_region
      _
    $region13: #{tpu_custom_call.1} parent=1 // pred_fallthru
      _
    // Predicated region
    $region14: #{tpu_custom_call.1} parent=1 // pred_check
      _
    $region15: #{tpu_custom_call.1} parent=1 // pred_check_branch
      %43 = sbr.rel (0) target = $region17
    $region16: #{tpu_custom_call.1} parent=1 // pred_region
      %s45 = ssub.s32 4096, 4096
      %46 = vsyncadd [#allocation7], %s45
      %s47 = sshll.u32 [#allocation8], 4
      %s48 = int_to_ptr.vmem [resolvable:$true] %s47
      %53 = dma.hbm_to_vmem [thread:$0]  %s3, 4096, %s48, [#allocation7], 128, 128, 8
    $region17: #{tpu_custom_call.1} parent=1 // pred_fallthru
      _
    // Predicated region
    $region18: #{tpu_custom_call.1} parent=1 // pred_check
      _
    $region19: #{tpu_custom_call.1} parent=1 // pred_check_branch
      %55 = sbr.rel (0) target = $region21
    $region20: #{tpu_custom_call.1} parent=1 // pred_region
      _
    $region21: #{tpu_custom_call.1} parent=1 // pred_fallthru
      _
    // Predicated region
    $region22: #{tpu_custom_call.1} parent=1 // pred_check
      _
    $region23: #{tpu_custom_call.1} parent=1 // pred_check_branch
      %57 = sbr.rel (0) target = $region25
    $region24: #{tpu_custom_call.1} parent=1 // pred_region
      %s58 = sadd.s32 0, 0
      %s59 = smul.u32 2, %s58
      %s61 = ssub.s32 4096, 4096
      %62 = vsyncadd [#allocation10], %s61
      %s63 = smul.addr %s59, 64
      %s64 = scalar_lea.hbm %s5, %s63
      %s65 = sshll.u32 [#allocation9], 4
      %s66 = int_to_ptr.vmem [resolvable:$true] %s65
      %71 = dma.hbm_to_vmem [thread:$0]  %s64, 4096, %s66, [#allocation10], 128, 128, 8
    $region25: #{tpu_custom_call.1} parent=1 // pred_fallthru
      _
    // Predicated region
    $region26: #{tpu_custom_call.1} parent=1 // pred_check
      _
    $region27: #{tpu_custom_call.1} parent=1 // pred_check_branch
      %73 = sbr.rel (0) target = $region29
    $region28: #{tpu_custom_call.1} parent=1 // pred_region
      %s74 = sadd.s32 0, 0
      %s75 = smul.u32 2, %s74
      %p76 = scmp.lt.s32.totalorder %s75, 1
      %s77 = scalar_select %p76, %s75, 1
      %s78 = scalar_lea.vmem %s6, %s77
      %s79 = sadd.s32 0, 0
      %s80 = smul.u32 2, %s79
    $region29: #{tpu_custom_call.1} parent=1 // pred_fallthru
      _
    // Predicated region
    $region30: #{tpu_custom_call.1} parent=1 // pred_check
      _
    $region31: #{tpu_custom_call.1} parent=1 // pred_check_branch
      %82 = sbr.rel (0) target = $region33
    $region32: #{tpu_custom_call.1} parent=1 // pred_region
      %83 = dma.done [#allocation4], 256
    $region33: #{tpu_custom_call.1} parent=1 // pred_fallthru
      _
    // Predicated region
    $region34: #{tpu_custom_call.1} parent=1 // pred_check
      _
    $region35: #{tpu_custom_call.1} parent=1 // pred_check_branch
      %85 = sbr.rel (0) target = $region37
    $region36: #{tpu_custom_call.1} parent=1 // pred_region
      %86 = dma.done [#allocation7], 4096
    $region37: #{tpu_custom_call.1} parent=1 // pred_fallthru
      _
    // Predicated region
    $region38: #{tpu_custom_call.1} parent=1 // pred_check
      _
    $region39: #{tpu_custom_call.1} parent=1 // pred_check_branch
      %88 = sbr.rel (0) target = $region41
    $region40: #{tpu_custom_call.1} parent=1 // pred_region
      %89 = dma.done [#allocation7], 4096
    $region41: #{tpu_custom_call.1} parent=1 // pred_fallthru
      _
    // Predicated region
    $region42: #{tpu_custom_call.1} parent=1 // pred_check
      _
    $region43: #{tpu_custom_call.1} parent=1 // pred_check_branch
      %91 = sbr.rel (0) target = $region45
    $region44: #{tpu_custom_call.1} parent=1 // pred_region
      %92 = dma.done [#allocation10], 4096
    $region45: #{tpu_custom_call.1} parent=1 // pred_fallthru
      _
    %s93 = sadd.s32 0, 0
    %s94 = smul.u32 2, %s93
    %p95 = scmp.lt.s32.totalorder %s94, 1
    %s96 = scalar_select %p95, %s94, 1
    %s97 = scalar_lea.vmem %s6, %s96
    %s98 = sadd.s32 0, 0
    %s99 = smul.u32 2, %s98
    %s100 = sadd.s32 0, 0
    %s101 = smul.u32 2, %s100
    %p102 = scmp.lt.s32.totalorder %s101, 1
    %s103 = scalar_select %p102, %s101, 1
    %s104 = scalar_lea.vmem %s6, %s103
    %s105 = sadd.s32 0, 0
    %s106 = smul.u32 2, %s105
    %s107 = sadd.s32 0, 0
    %s108 = smul.u32 2, %s107
    %p109 = scmp.eq.s32.totalorder 0, 0
    // Predicated region
    $region46: #{tpu_custom_call.1} parent=1 // pred_check
      %p110 = pneg %p109
    $region47: #{tpu_custom_call.1} parent=1 // pred_check_branch
      %112 = sbr.rel (%p110) target = $region49
    $region48: #{tpu_custom_call.1} parent=1 // pred_region
      %v113 = vld [vmem:[#allocation3] sm:$0xff]
      %v114 = vld [vmem:[#allocation3 + $0x8] sm:$0xff]
      %v115 = vld [vmem:[#allocation6] sm:$0xff]
      %v116 = vld [vmem:[#allocation6 + $0x8] sm:$0xff]
      %v117 = vld [vmem:[#allocation6 + $0x10] sm:$0xff]
      %v118 = vld [vmem:[#allocation6 + $0x18] sm:$0xff]
      %v119 = vld [vmem:[#allocation6 + $0x20] sm:$0xff]
      %v120 = vld [vmem:[#allocation6 + $0x28] sm:$0xff]
      %v121 = vld [vmem:[#allocation6 + $0x30] sm:$0xff]
      %v122 = vld [vmem:[#allocation6 + $0x38] sm:$0xff]
      %v123 = vld [vmem:[#allocation6 + $0x40] sm:$0xff]
      %v124 = vld [vmem:[#allocation6 + $0x48] sm:$0xff]
      %v125 = vld [vmem:[#allocation6 + $0x50] sm:$0xff]
      %v126 = vld [vmem:[#allocation6 + $0x58] sm:$0xff]
      %v127 = vld [vmem:[#allocation6 + $0x60] sm:$0xff]
      %v128 = vld [vmem:[#allocation6 + $0x68] sm:$0xff]
      %v129 = vld [vmem:[#allocation6 + $0x70] sm:$0xff]
      %v130 = vld [vmem:[#allocation6 + $0x78] sm:$0xff]
      %v131 = vld [vmem:[#allocation6 + $0x80] sm:$0xff]
      %v132 = vld [vmem:[#allocation6 + $0x88] sm:$0xff]
      %v133 = vld [vmem:[#allocation6 + $0x90] sm:$0xff]
      %v134 = vld [vmem:[#allocation6 + $0x98] sm:$0xff]
      %v135 = vld [vmem:[#allocation6 + $0xa0] sm:$0xff]
      %v136 = vld [vmem:[#allocation6 + $0xa8] sm:$0xff]
      %v137 = vld [vmem:[#allocation6 + $0xb0] sm:$0xff]
      %v138 = vld [vmem:[#allocation6 + $0xb8] sm:$0xff]
      %v139 = vld [vmem:[#allocation6 + $0xc0] sm:$0xff]
      %v140 = vld [vmem:[#allocation6 + $0xc8] sm:$0xff]
      %v141 = vld [vmem:[#allocation6 + $0xd0] sm:$0xff]
      %v142 = vld [vmem:[#allocation6 + $0xd8] sm:$0xff]
      %v143 = vld [vmem:[#allocation6 + $0xe0] sm:$0xff]
      %v144 = vld [vmem:[#allocation6 + $0xe8] sm:$0xff]
      %v145 = vld [vmem:[#allocation6 + $0xf0] sm:$0xff]
      %v146 = vld [vmem:[#allocation6 + $0xf8] sm:$0xff]
      %v147 = vld [vmem:[%s2] sm:$0x3]
      %v149 = vlaneseq
      %v150 = vshrl.u32 %v149, 7
      %v151 = vsub.s32 0, %v150
      %v152 = vrot.slane %v147, %v151
      %v153 = vlaneseq
      %v154 = vshrl.u32 %v153, 7
      %v155 = vsub.s32 1, %v154
      %v156 = vrot.slane %v147, %v155
      %v161 = vunpack.c.l.b16 %v113
      %v162 = vunpack.c.h.b16 %v113
      %v163 = vunpack.c.l.b16 %v114
      %v164 = vunpack.c.h.b16 %v114
      %v165 = vpack.c.b16 %v163, %v161
      %v166 = vpack.c.b16 %v164, %v162
      %v201 = vunpack.c.l.b16 %v115
      %v202 = vunpack.c.h.b16 %v115
      %v203 = vunpack.c.l.b16 %v116
      %v204 = vunpack.c.h.b16 %v116
      %v205 = vunpack.c.l.b16 %v117
      %v206 = vunpack.c.h.b16 %v117
      %v207 = vunpack.c.l.b16 %v118
      %v208 = vunpack.c.h.b16 %v118
      %v209 = vunpack.c.l.b16 %v119
      %v210 = vunpack.c.h.b16 %v119
      %v211 = vunpack.c.l.b16 %v120
      %v212 = vunpack.c.h.b16 %v120
      %v213 = vunpack.c.l.b16 %v121
      %v214 = vunpack.c.h.b16 %v121
      %v215 = vunpack.c.l.b16 %v122
      %v216 = vunpack.c.h.b16 %v122
      %v217 = vunpack.c.l.b16 %v123
      %v218 = vunpack.c.h.b16 %v123
      %v219 = vunpack.c.l.b16 %v124
      %v220 = vunpack.c.h.b16 %v124
      %v221 = vunpack.c.l.b16 %v125
      %v222 = vunpack.c.h.b16 %v125
      %v223 = vunpack.c.l.b16 %v126
      %v224 = vunpack.c.h.b16 %v126
      %v225 = vunpack.c.l.b16 %v127
      %v226 = vunpack.c.h.b16 %v127
      %v227 = vunpack.c.l.b16 %v128
      %v228 = vunpack.c.h.b16 %v128
      %v229 = vunpack.c.l.b16 %v129
      %v230 = vunpack.c.h.b16 %v129
      %v231 = vunpack.c.l.b16 %v130
      %v232 = vunpack.c.h.b16 %v130
      %v233 = vunpack.c.l.b16 %v131
      %v234 = vunpack.c.h.b16 %v131
      %v235 = vunpack.c.l.b16 %v132
      %v236 = vunpack.c.h.b16 %v132
      %v237 = vunpack.c.l.b16 %v133
      %v238 = vunpack.c.h.b16 %v133
      %v239 = vunpack.c.l.b16 %v134
      %v240 = vunpack.c.h.b16 %v134
      %v241 = vunpack.c.l.b16 %v135
      %v242 = vunpack.c.h.b16 %v135
      %v243 = vunpack.c.l.b16 %v136
      %v244 = vunpack.c.h.b16 %v136
      %v245 = vunpack.c.l.b16 %v137
      %v246 = vunpack.c.h.b16 %v137
      %v247 = vunpack.c.l.b16 %v138
      %v248 = vunpack.c.h.b16 %v138
      %v249 = vunpack.c.l.b16 %v139
      %v250 = vunpack.c.h.b16 %v139
      %v251 = vunpack.c.l.b16 %v140
      %v252 = vunpack.c.h.b16 %v140
      %v253 = vunpack.c.l.b16 %v141
      %v254 = vunpack.c.h.b16 %v141
      %v255 = vunpack.c.l.b16 %v142
      %v256 = vunpack.c.h.b16 %v142
      %v257 = vunpack.c.l.b16 %v143
      %v258 = vunpack.c.h.b16 %v143
      %v259 = vunpack.c.l.b16 %v144
      %v260 = vunpack.c.h.b16 %v144
      %v261 = vunpack.c.l.b16 %v145
      %v262 = vunpack.c.h.b16 %v145
      %v263 = vunpack.c.l.b16 %v146
      %v264 = vunpack.c.h.b16 %v146
      %v265 = vpack.c.b16 %v203, %v201
      %v266 = vpack.c.b16 %v204, %v202
      %v267 = vpack.c.b16 %v207, %v205
      %v268 = vpack.c.b16 %v208, %v206
      %v269 = vpack.c.b16 %v211, %v209
      %v270 = vpack.c.b16 %v212, %v210
      %v271 = vpack.c.b16 %v215, %v213
      %v272 = vpack.c.b16 %v216, %v214
      %v273 = vpack.c.b16 %v219, %v217
      %v274 = vpack.c.b16 %v220, %v218
      %v275 = vpack.c.b16 %v223, %v221
      %v276 = vpack.c.b16 %v224, %v222
      %v277 = vpack.c.b16 %v227, %v225
      %v278 = vpack.c.b16 %v228, %v226
      %v279 = vpack.c.b16 %v231, %v229
      %v280 = vpack.c.b16 %v232, %v230
      %v281 = vpack.c.b16 %v235, %v233
      %v282 = vpack.c.b16 %v236, %v234
      %v283 = vpack.c.b16 %v239, %v237
      %v284 = vpack.c.b16 %v240, %v238
      %v285 = vpack.c.b16 %v243, %v241
      %v286 = vpack.c.b16 %v244, %v242
      %v287 = vpack.c.b16 %v247, %v245
      %v288 = vpack.c.b16 %v248, %v246
      %v289 = vpack.c.b16 %v251, %v249
      %v290 = vpack.c.b16 %v252, %v250
      %v291 = vpack.c.b16 %v255, %v253
      %v292 = vpack.c.b16 %v256, %v254
      %v293 = vpack.c.b16 %v259, %v257
      %v294 = vpack.c.b16 %v260, %v258
      %v295 = vpack.c.b16 %v263, %v261
      %v296 = vpack.c.b16 %v264, %v262
      %329 = vmatprep.subr.bf16.mxu0 %v266
      %330 = vmatpush1.bf16.msra.mxu0 %v265
      %331 = vmatprep.subr.bf16.mxu0 %v268
      %332 = vmatpush1.bf16.msra.mxu0 %v267
      %333 = vmatprep.subr.bf16.mxu0 %v270
      %334 = vmatpush1.bf16.msra.mxu0 %v269
      %335 = vmatprep.subr.bf16.mxu0 %v272
      %336 = vmatpush1.bf16.msra.mxu0 %v271
      %337 = vmatprep.subr.bf16.mxu0 %v274
      %338 = vmatpush1.bf16.msra.mxu0 %v273
      %339 = vmatprep.subr.bf16.mxu0 %v276
      %340 = vmatpush1.bf16.msra.mxu0 %v275
      %341 = vmatprep.subr.bf16.mxu0 %v278
      %342 = vmatpush1.bf16.msra.mxu0 %v277
      %343 = vmatprep.subr.bf16.mxu0 %v280
      %344 = vmatpush1.bf16.msra.mxu0 %v279
      %345 = vmatprep.subr.bf16.mxu0 %v282
      %346 = vmatpush1.bf16.msra.mxu0 %v281
      %347 = vmatprep.subr.bf16.mxu0 %v284
      %348 = vmatpush1.bf16.msra.mxu0 %v283
      %349 = vmatprep.subr.bf16.mxu0 %v286
      %350 = vmatpush1.bf16.msra.mxu0 %v285
      %351 = vmatprep.subr.bf16.mxu0 %v288
      %352 = vmatpush1.bf16.msra.mxu0 %v287
      %353 = vmatprep.subr.bf16.mxu0 %v290
      %354 = vmatpush1.bf16.msra.mxu0 %v289
      %355 = vmatprep.subr.bf16.mxu0 %v292
      %356 = vmatpush1.bf16.msra.mxu0 %v291
      %357 = vmatprep.subr.bf16.mxu0 %v294
      %358 = vmatpush1.bf16.msra.mxu0 %v293
      %359 = vmatprep.subr.bf16.mxu0 %v296
      %360 = vmatpush1.bf16.msra.mxu0 %v295
      %361 = vmatprep.mubr.bf16.mxu0 %v166
      %362 = vmatmul.mubr.bf16.gmra.mrb[0].mxu0 %v165
      %v363 = vpop.f32.mrb[0].mxu0
      %v364 = vadd.f32 %v152, %v363
      %v365 = vpop.f32.mrb[0].mxu0
      %v366 = vadd.f32 %v156, %v365
      %v367 = vpop.f32.mrb[0].mxu0
      %v368 = vadd.f32 %v152, %v367
      %v369 = vpop.f32.mrb[0].mxu0
      %v370 = vadd.f32 %v156, %v369
      %371 = vdwg.mxu0
      %v372 = vmul.f32 %v364, 0.5
      %v373 = vmul.f32 %v366, 0.5
      %v374 = vmul.f32 %v368, 0.5
      %v375 = vmul.f32 %v370, 0.5
      %v376 = vtanh.pop %v372
      %v377 = vtanh.pop %v373
      %v378 = vtanh.pop %v374
      %v379 = vtanh.pop %v375
      %v380 = vadd.f32 %v376, 1.0
      %v381 = vadd.f32 %v377, 1.0
      %v382 = vadd.f32 %v378, 1.0
      %v383 = vadd.f32 %v379, 1.0
      %v384 = vmul.f32 %v380, 0.5
      %v385 = vmul.f32 %v381, 0.5
      %v386 = vmul.f32 %v382, 0.5
      %v387 = vmul.f32 %v383, 0.5
      %v388 = vpack.c.bf16 %v386, %v384
      %v389 = vpack.c.bf16 %v387, %v385
      %v390 = vld [vmem:[#allocation8] sm:$0xff]
      %v391 = vld [vmem:[#allocation8 + $0x8] sm:$0xff]
      %v392 = vld [vmem:[#allocation8 + $0x10] sm:$0xff]
      %v393 = vld [vmem:[#allocation8 + $0x18] sm:$0xff]
      %v394 = vld [vmem:[#allocation8 + $0x20] sm:$0xff]
      %v395 = vld [vmem:[#allocation8 + $0x28] sm:$0xff]
      %v396 = vld [vmem:[#allocation8 + $0x30] sm:$0xff]
      %v397 = vld [vmem:[#allocation8 + $0x38] sm:$0xff]
      %v398 = vld [vmem:[#allocation8 + $0x40] sm:$0xff]
      %v399 = vld [vmem:[#allocation8 + $0x48] sm:$0xff]
      %v400 = vld [vmem:[#allocation8 + $0x50] sm:$0xff]
      %v401 = vld [vmem:[#allocation8 + $0x58] sm:$0xff]
      %v402 = vld [vmem:[#allocation8 + $0x60] sm:$0xff]
      %v403 = vld [vmem:[#allocation8 + $0x68] sm:$0xff]
      %v404 = vld [vmem:[#allocation8 + $0x70] sm:$0xff]
      %v405 = vld [vmem:[#allocation8 + $0x78] sm:$0xff]
      %v406 = vld [vmem:[#allocation8 + $0x80] sm:$0xff]
      %v407 = vld [vmem:[#allocation8 + $0x88] sm:$0xff]
      %v408 = vld [vmem:[#allocation8 + $0x90] sm:$0xff]
      %v409 = vld [vmem:[#allocation8 + $0x98] sm:$0xff]
      %v410 = vld [vmem:[#allocation8 + $0xa0] sm:$0xff]
      %v411 = vld [vmem:[#allocation8 + $0xa8] sm:$0xff]
      %v412 = vld [vmem:[#allocation8 + $0xb0] sm:$0xff]
      %v413 = vld [vmem:[#allocation8 + $0xb8] sm:$0xff]
      %v414 = vld [vmem:[#allocation8 + $0xc0] sm:$0xff]
      %v415 = vld [vmem:[#allocation8 + $0xc8] sm:$0xff]
      %v416 = vld [vmem:[#allocation8 + $0xd0] sm:$0xff]
      %v417 = vld [vmem:[#allocation8 + $0xd8] sm:$0xff]
      %v418 = vld [vmem:[#allocation8 + $0xe0] sm:$0xff]
      %v419 = vld [vmem:[#allocation8 + $0xe8] sm:$0xff]
      %v420 = vld [vmem:[#allocation8 + $0xf0] sm:$0xff]
      %v421 = vld [vmem:[#allocation8 + $0xf8] sm:$0xff]
      %v422 = vld [vmem:[%s4] sm:$0x3]
      %v424 = vlaneseq
      %v425 = vshrl.u32 %v424, 7
      %v426 = vsub.s32 0, %v425
      %v427 = vrot.slane %v422, %v426
      %v428 = vlaneseq
      %v429 = vshrl.u32 %v428, 7
      %v430 = vsub.s32 1, %v429
      %v431 = vrot.slane %v422, %v430
      %v466 = vunpack.c.l.b16 %v390
      %v467 = vunpack.c.h.b16 %v390
      %v468 = vunpack.c.l.b16 %v391
      %v469 = vunpack.c.h.b16 %v391
      %v470 = vunpack.c.l.b16 %v392
      %v471 = vunpack.c.h.b16 %v392
      %v472 = vunpack.c.l.b16 %v393
      %v473 = vunpack.c.h.b16 %v393
      %v474 = vunpack.c.l.b16 %v394
      %v475 = vunpack.c.h.b16 %v394
      %v476 = vunpack.c.l.b16 %v395
      %v477 = vunpack.c.h.b16 %v395
      %v478 = vunpack.c.l.b16 %v396
      %v479 = vunpack.c.h.b16 %v396
      %v480 = vunpack.c.l.b16 %v397
      %v481 = vunpack.c.h.b16 %v397
      %v482 = vunpack.c.l.b16 %v398
      %v483 = vunpack.c.h.b16 %v398
      %v484 = vunpack.c.l.b16 %v399
      %v485 = vunpack.c.h.b16 %v399
      %v486 = vunpack.c.l.b16 %v400
      %v487 = vunpack.c.h.b16 %v400
      %v488 = vunpack.c.l.b16 %v401
      %v489 = vunpack.c.h.b16 %v401
      %v490 = vunpack.c.l.b16 %v402
      %v491 = vunpack.c.h.b16 %v402
      %v492 = vunpack.c.l.b16 %v403
      %v493 = vunpack.c.h.b16 %v403
      %v494 = vunpack.c.l.b16 %v404
      %v495 = vunpack.c.h.b16 %v404
      %v496 = vunpack.c.l.b16 %v405
      %v497 = vunpack.c.h.b16 %v405
      %v498 = vunpack.c.l.b16 %v406
      %v499 = vunpack.c.h.b16 %v406
      %v500 = vunpack.c.l.b16 %v407
      %v501 = vunpack.c.h.b16 %v407
      %v502 = vunpack.c.l.b16 %v408
      %v503 = vunpack.c.h.b16 %v408
      %v504 = vunpack.c.l.b16 %v409
      %v505 = vunpack.c.h.b16 %v409
      %v506 = vunpack.c.l.b16 %v410
      %v507 = vunpack.c.h.b16 %v410
      %v508 = vunpack.c.l.b16 %v411
      %v509 = vunpack.c.h.b16 %v411
      %v510 = vunpack.c.l.b16 %v412
      %v511 = vunpack.c.h.b16 %v412
      %v512 = vunpack.c.l.b16 %v413
      %v513 = vunpack.c.h.b16 %v413
      %v514 = vunpack.c.l.b16 %v414
      %v515 = vunpack.c.h.b16 %v414
      %v516 = vunpack.c.l.b16 %v415
      %v517 = vunpack.c.h.b16 %v415
      %v518 = vunpack.c.l.b16 %v416
      %v519 = vunpack.c.h.b16 %v416
      %v520 = vunpack.c.l.b16 %v417
      %v521 = vunpack.c.h.b16 %v417
      %v522 = vunpack.c.l.b16 %v418
      %v523 = vunpack.c.h.b16 %v418
      %v524 = vunpack.c.l.b16 %v419
      %v525 = vunpack.c.h.b16 %v419
      %v526 = vunpack.c.l.b16 %v420
      %v527 = vunpack.c.h.b16 %v420
      %v528 = vunpack.c.l.b16 %v421
      %v529 = vunpack.c.h.b16 %v421
      %v530 = vpack.c.b16 %v468, %v466
      %v531 = vpack.c.b16 %v469, %v467
      %v532 = vpack.c.b16 %v472, %v470
      %v533 = vpack.c.b16 %v473, %v471
      %v534 = vpack.c.b16 %v476, %v474
      %v535 = vpack.c.b16 %v477, %v475
      %v536 = vpack.c.b16 %v480, %v478
      %v537 = vpack.c.b16 %v481, %v479
      %v538 = vpack.c.b16 %v484, %v482
      %v539 = vpack.c.b16 %v485, %v483
      %v540 = vpack.c.b16 %v488, %v486
      %v541 = vpack.c.b16 %v489, %v487
      %v542 = vpack.c.b16 %v492, %v490
      %v543 = vpack.c.b16 %v493, %v491
      %v544 = vpack.c.b16 %v496, %v494
      %v545 = vpack.c.b16 %v497, %v495
      %v546 = vpack.c.b16 %v500, %v498
      %v547 = vpack.c.b16 %v501, %v499
      %v548 = vpack.c.b16 %v504, %v502
      %v549 = vpack.c.b16 %v505, %v503
      %v550 = vpack.c.b16 %v508, %v506
      %v551 = vpack.c.b16 %v509, %v507
      %v552 = vpack.c.b16 %v512, %v510
      %v553 = vpack.c.b16 %v513, %v511
      %v554 = vpack.c.b16 %v516, %v514
      %v555 = vpack.c.b16 %v517, %v515
      %v556 = vpack.c.b16 %v520, %v518
      %v557 = vpack.c.b16 %v521, %v519
      %v558 = vpack.c.b16 %v524, %v522
      %v559 = vpack.c.b16 %v525, %v523
      %v560 = vpack.c.b16 %v528, %v526
      %v561 = vpack.c.b16 %v529, %v527
      %594 = vmatprep.subr.bf16.mxu0 %v531
      %595 = vmatpush1.bf16.msra.mxu0 %v530
      %596 = vmatprep.subr.bf16.mxu0 %v533
      %597 = vmatpush1.bf16.msra.mxu0 %v532
      %598 = vmatprep.subr.bf16.mxu0 %v535
      %599 = vmatpush1.bf16.msra.mxu0 %v534
      %600 = vmatprep.subr.bf16.mxu0 %v537
      %601 = vmatpush1.bf16.msra.mxu0 %v536
      %602 = vmatprep.subr.bf16.mxu0 %v539
      %603 = vmatpush1.bf16.msra.mxu0 %v538
      %604 = vmatprep.subr.bf16.mxu0 %v541
      %605 = vmatpush1.bf16.msra.mxu0 %v540
      %606 = vmatprep.subr.bf16.mxu0 %v543
      %607 = vmatpush1.bf16.msra.mxu0 %v542
      %608 = vmatprep.subr.bf16.mxu0 %v545
      %609 = vmatpush1.bf16.msra.mxu0 %v544
      %610 = vmatprep.subr.bf16.mxu0 %v547
      %611 = vmatpush1.bf16.msra.mxu0 %v546
      %612 = vmatprep.subr.bf16.mxu0 %v549
      %613 = vmatpush1.bf16.msra.mxu0 %v548
      %614 = vmatprep.subr.bf16.mxu0 %v551
      %615 = vmatpush1.bf16.msra.mxu0 %v550
      %616 = vmatprep.subr.bf16.mxu0 %v553
      %617 = vmatpush1.bf16.msra.mxu0 %v552
      %618 = vmatprep.subr.bf16.mxu0 %v555
      %619 = vmatpush1.bf16.msra.mxu0 %v554
      %620 = vmatprep.subr.bf16.mxu0 %v557
      %621 = vmatpush1.bf16.msra.mxu0 %v556
      %622 = vmatprep.subr.bf16.mxu0 %v559
      %623 = vmatpush1.bf16.msra.mxu0 %v558
      %624 = vmatprep.subr.bf16.mxu0 %v561
      %625 = vmatpush1.bf16.msra.mxu0 %v560
      %626 = vmatprep.mubr.bf16.mxu0 %v389
      %627 = vmatmul.mubr.bf16.gmra.mrb[0].mxu0 %v388
      %v628 = vpop.f32.mrb[0].mxu0
      %v629 = vadd.f32 %v427, %v628
      %v630 = vpop.f32.mrb[0].mxu0
      %v631 = vadd.f32 %v431, %v630
      %v632 = vpop.f32.mrb[0].mxu0
      %v633 = vadd.f32 %v427, %v632
      %v634 = vpop.f32.mrb[0].mxu0
      %v635 = vadd.f32 %v431, %v634
      %636 = vdwg.mxu0
      %v637 = vmul.f32 %v629, 0.5
      %v638 = vmul.f32 %v631, 0.5
      %v639 = vmul.f32 %v633, 0.5
      %v640 = vmul.f32 %v635, 0.5
      %v641 = vtanh.pop %v637
      %v642 = vtanh.pop %v638
      %v643 = vtanh.pop %v639
      %v644 = vtanh.pop %v640
      %v645 = vadd.f32 %v641, 1.0
      %v646 = vadd.f32 %v642, 1.0
      %v647 = vadd.f32 %v643, 1.0
      %v648 = vadd.f32 %v644, 1.0
      %v649 = vmul.f32 %v645, 0.5
      %v650 = vmul.f32 %v646, 0.5
      %v651 = vmul.f32 %v647, 0.5
      %v652 = vmul.f32 %v648, 0.5
      %v653 = vpack.c.bf16 %v651, %v649
      %v654 = vpack.c.bf16 %v652, %v650
      %655 = vst [vmem:[#allocation2] sm:$0xff] %v653
      %656 = vst [vmem:[#allocation2 + $0x8] sm:$0xff] %v654
    $region49: #{tpu_custom_call.1} parent=1 // pred_fallthru
      _
    %v657 = vld [vmem:[#allocation2] sm:$0xff]
    %v658 = vld [vmem:[#allocation2 + $0x8] sm:$0xff]
    %v659 = vld [vmem:[#allocation9] sm:$0xff]
    %v660 = vld [vmem:[#allocation9 + $0x8] sm:$0xff]
    %v661 = vld [vmem:[#allocation9 + $0x10] sm:$0xff]
    %v662 = vld [vmem:[#allocation9 + $0x18] sm:$0xff]
    %v663 = vld [vmem:[#allocation9 + $0x20] sm:$0xff]
    %v664 = vld [vmem:[#allocation9 + $0x28] sm:$0xff]
    %v665 = vld [vmem:[#allocation9 + $0x30] sm:$0xff]
    %v666 = vld [vmem:[#allocation9 + $0x38] sm:$0xff]
    %v667 = vld [vmem:[#allocation9 + $0x40] sm:$0xff]
    %v668 = vld [vmem:[#allocation9 + $0x48] sm:$0xff]
    %v669 = vld [vmem:[#allocation9 + $0x50] sm:$0xff]
    %v670 = vld [vmem:[#allocation9 + $0x58] sm:$0xff]
    %v671 = vld [vmem:[#allocation9 + $0x60] sm:$0xff]
    %v672 = vld [vmem:[#allocation9 + $0x68] sm:$0xff]
    %v673 = vld [vmem:[#allocation9 + $0x70] sm:$0xff]
    %v674 = vld [vmem:[#allocation9 + $0x78] sm:$0xff]
    %v675 = vld [vmem:[#allocation9 + $0x80] sm:$0xff]
    %v676 = vld [vmem:[#allocation9 + $0x88] sm:$0xff]
    %v677 = vld [vmem:[#allocation9 + $0x90] sm:$0xff]
    %v678 = vld [vmem:[#allocation9 + $0x98] sm:$0xff]
    %v679 = vld [vmem:[#allocation9 + $0xa0] sm:$0xff]
    %v680 = vld [vmem:[#allocation9 + $0xa8] sm:$0xff]
    %v681 = vld [vmem:[#allocation9 + $0xb0] sm:$0xff]
    %v682 = vld [vmem:[#allocation9 + $0xb8] sm:$0xff]
    %v683 = vld [vmem:[#allocation9 + $0xc0] sm:$0xff]
    %v684 = vld [vmem:[#allocation9 + $0xc8] sm:$0xff]
    %v685 = vld [vmem:[#allocation9 + $0xd0] sm:$0xff]
    %v686 = vld [vmem:[#allocation9 + $0xd8] sm:$0xff]
    %v687 = vld [vmem:[#allocation9 + $0xe0] sm:$0xff]
    %v688 = vld [vmem:[#allocation9 + $0xe8] sm:$0xff]
    %v689 = vld [vmem:[#allocation9 + $0xf0] sm:$0xff]
    %v690 = vld [vmem:[#allocation9 + $0xf8] sm:$0xff]
    %v691 = vld [vmem:[%s104] sm:$0x3]
    %v693 = vlaneseq
    %v694 = vshrl.u32 %v693, 7
    %v695 = vsub.s32 0, %v694
    %v696 = vrot.slane %v691, %v695
    %v697 = vlaneseq
    %v698 = vshrl.u32 %v697, 7
    %v699 = vsub.s32 1, %v698
    %v700 = vrot.slane %v691, %v699
    %v735 = vunpack.c.l.b16 %v659
    %v736 = vunpack.c.h.b16 %v659
    %v737 = vunpack.c.l.b16 %v660
    %v738 = vunpack.c.h.b16 %v660
    %v739 = vunpack.c.l.b16 %v661
    %v740 = vunpack.c.h.b16 %v661
    %v741 = vunpack.c.l.b16 %v662
    %v742 = vunpack.c.h.b16 %v662
    %v743 = vunpack.c.l.b16 %v663
    %v744 = vunpack.c.h.b16 %v663
    %v745 = vunpack.c.l.b16 %v664
    %v746 = vunpack.c.h.b16 %v664
    %v747 = vunpack.c.l.b16 %v665
    %v748 = vunpack.c.h.b16 %v665
    %v749 = vunpack.c.l.b16 %v666
    %v750 = vunpack.c.h.b16 %v666
    %v751 = vunpack.c.l.b16 %v667
    %v752 = vunpack.c.h.b16 %v667
    %v753 = vunpack.c.l.b16 %v668
    %v754 = vunpack.c.h.b16 %v668
    %v755 = vunpack.c.l.b16 %v669
    %v756 = vunpack.c.h.b16 %v669
    %v757 = vunpack.c.l.b16 %v670
    %v758 = vunpack.c.h.b16 %v670
    %v759 = vunpack.c.l.b16 %v671
    %v760 = vunpack.c.h.b16 %v671
    %v761 = vunpack.c.l.b16 %v672
    %v762 = vunpack.c.h.b16 %v672
    %v763 = vunpack.c.l.b16 %v673
    %v764 = vunpack.c.h.b16 %v673
    %v765 = vunpack.c.l.b16 %v674
    %v766 = vunpack.c.h.b16 %v674
    %v767 = vunpack.c.l.b16 %v675
    %v768 = vunpack.c.h.b16 %v675
    %v769 = vunpack.c.l.b16 %v676
    %v770 = vunpack.c.h.b16 %v676
    %v771 = vunpack.c.l.b16 %v677
    %v772 = vunpack.c.h.b16 %v677
    %v773 = vunpack.c.l.b16 %v678
    %v774 = vunpack.c.h.b16 %v678
    %v775 = vunpack.c.l.b16 %v679
    %v776 = vunpack.c.h.b16 %v679
    %v777 = vunpack.c.l.b16 %v680
    %v778 = vunpack.c.h.b16 %v680
    %v779 = vunpack.c.l.b16 %v681
    %v780 = vunpack.c.h.b16 %v681
    %v781 = vunpack.c.l.b16 %v682
    %v782 = vunpack.c.h.b16 %v682
    %v783 = vunpack.c.l.b16 %v683
    %v784 = vunpack.c.h.b16 %v683
    %v785 = vunpack.c.l.b16 %v684
    %v786 = vunpack.c.h.b16 %v684
    %v787 = vunpack.c.l.b16 %v685
    %v788 = vunpack.c.h.b16 %v685
    %v789 = vunpack.c.l.b16 %v686
    %v790 = vunpack.c.h.b16 %v686
    %v791 = vunpack.c.l.b16 %v687
    %v792 = vunpack.c.h.b16 %v687
    %v793 = vunpack.c.l.b16 %v688
    %v794 = vunpack.c.h.b16 %v688
    %v795 = vunpack.c.l.b16 %v689
    %v796 = vunpack.c.h.b16 %v689
    %v797 = vunpack.c.l.b16 %v690
    %v798 = vunpack.c.h.b16 %v690
    %v799 = vpack.c.b16 %v737, %v735
    %v800 = vpack.c.b16 %v738, %v736
    %v801 = vpack.c.b16 %v741, %v739
    %v802 = vpack.c.b16 %v742, %v740
    %v803 = vpack.c.b16 %v745, %v743
    %v804 = vpack.c.b16 %v746, %v744
    %v805 = vpack.c.b16 %v749, %v747
    %v806 = vpack.c.b16 %v750, %v748
    %v807 = vpack.c.b16 %v753, %v751
    %v808 = vpack.c.b16 %v754, %v752
    %v809 = vpack.c.b16 %v757, %v755
    %v810 = vpack.c.b16 %v758, %v756
    %v811 = vpack.c.b16 %v761, %v759
    %v812 = vpack.c.b16 %v762, %v760
    %v813 = vpack.c.b16 %v765, %v763
    %v814 = vpack.c.b16 %v766, %v764
    %v815 = vpack.c.b16 %v769, %v767
    %v816 = vpack.c.b16 %v770, %v768
    %v817 = vpack.c.b16 %v773, %v771
    %v818 = vpack.c.b16 %v774, %v772
    %v819 = vpack.c.b16 %v777, %v775
    %v820 = vpack.c.b16 %v778, %v776
    %v821 = vpack.c.b16 %v781, %v779
    %v822 = vpack.c.b16 %v782, %v780
    %v823 = vpack.c.b16 %v785, %v783
    %v824 = vpack.c.b16 %v786, %v784
    %v825 = vpack.c.b16 %v789, %v787
    %v826 = vpack.c.b16 %v790, %v788
    %v827 = vpack.c.b16 %v793, %v791
    %v828 = vpack.c.b16 %v794, %v792
    %v829 = vpack.c.b16 %v797, %v795
    %v830 = vpack.c.b16 %v798, %v796
    %863 = vmatprep.subr.bf16.mxu0 %v800
    %864 = vmatpush1.bf16.msra.mxu0 %v799
    %865 = vmatprep.subr.bf16.mxu0 %v802
    %866 = vmatpush1.bf16.msra.mxu0 %v801
    %867 = vmatprep.subr.bf16.mxu0 %v804
    %868 = vmatpush1.bf16.msra.mxu0 %v803
    %869 = vmatprep.subr.bf16.mxu0 %v806
    %870 = vmatpush1.bf16.msra.mxu0 %v805
    %871 = vmatprep.subr.bf16.mxu0 %v808
    %872 = vmatpush1.bf16.msra.mxu0 %v807
    %873 = vmatprep.subr.bf16.mxu0 %v810
    %874 = vmatpush1.bf16.msra.mxu0 %v809
    %875 = vmatprep.subr.bf16.mxu0 %v812
    %876 = vmatpush1.bf16.msra.mxu0 %v811
    %877 = vmatprep.subr.bf16.mxu0 %v814
    %878 = vmatpush1.bf16.msra.mxu0 %v813
    %879 = vmatprep.subr.bf16.mxu0 %v816
    %880 = vmatpush1.bf16.msra.mxu0 %v815
    %881 = vmatprep.subr.bf16.mxu0 %v818
    %882 = vmatpush1.bf16.msra.mxu0 %v817
    %883 = vmatprep.subr.bf16.mxu0 %v820
    %884 = vmatpush1.bf16.msra.mxu0 %v819
    %885 = vmatprep.subr.bf16.mxu0 %v822
    %886 = vmatpush1.bf16.msra.mxu0 %v821
    %887 = vmatprep.subr.bf16.mxu0 %v824
    %888 = vmatpush1.bf16.msra.mxu0 %v823
    %889 = vmatprep.subr.bf16.mxu0 %v826
    %890 = vmatpush1.bf16.msra.mxu0 %v825
    %891 = vmatprep.subr.bf16.mxu0 %v828
    %892 = vmatpush1.bf16.msra.mxu0 %v827
    %893 = vmatprep.subr.bf16.mxu0 %v830
    %894 = vmatpush1.bf16.msra.mxu0 %v829
    %895 = vmatprep.mubr.bf16.mxu0 %v658
    %896 = vmatmul.mubr.bf16.gmra.mrb[0].mxu0 %v657
    %v897 = vpop.f32.mrb[0].mxu0
    %v898 = vadd.f32 %v696, %v897
    %v899 = vpop.f32.mrb[0].mxu0
    %v900 = vadd.f32 %v700, %v899
    %v901 = vpop.f32.mrb[0].mxu0
    %v902 = vadd.f32 %v696, %v901
    %v903 = vpop.f32.mrb[0].mxu0
    %v904 = vadd.f32 %v700, %v903
    %905 = vdwg.mxu0
    %v906 = vmul.f32 %v898, 0.5
    %v907 = vmul.f32 %v900, 0.5
    %v908 = vmul.f32 %v902, 0.5
    %v909 = vmul.f32 %v904, 0.5
    %v910 = vtanh.pop %v906
    %v911 = vtanh.pop %v907
    %v912 = vtanh.pop %v908
    %v913 = vtanh.pop %v909
    %v914 = vadd.f32 %v910, 1.0
    %v915 = vadd.f32 %v911, 1.0
    %v916 = vadd.f32 %v912, 1.0
    %v917 = vadd.f32 %v913, 1.0
    %v918 = vmul.f32 %v914, 0.5
    %v919 = vmul.f32 %v915, 0.5
    %v920 = vmul.f32 %v916, 0.5
    %v921 = vmul.f32 %v917, 0.5
    %922 = vst [vmem:[#allocation11] sm:$0xff] %v918
    %923 = vst [vmem:[#allocation11 + $0x8] sm:$0xff] %v919
    %924 = vst [vmem:[#allocation11 + $0x10] sm:$0xff] %v920
    %925 = vst [vmem:[#allocation11 + $0x18] sm:$0xff] %v921
    // Predicated region
    $region50: #{tpu_custom_call.1} parent=1 // pred_check
      _
    $region51: #{tpu_custom_call.1} parent=1 // pred_check_branch
      %927 = sbr.rel (0) target = $region53
    $region52: #{tpu_custom_call.1} parent=1 // pred_region
      %s928 = sadd.s32 0, 0
      %s929 = smul.u32 2, %s928
      %s931 = ssub.s32 512, 512
      %932 = vsyncadd [#allocation5], %s931
      %s933 = smul.addr %s929, 128
      %s934 = scalar_lea.hbm %s7, %s933
      %s935 = sshll.u32 [#allocation11], 4
      %s936 = int_to_ptr.vmem [resolvable:$true] %s935
      %941 = dma.vmem_to_hbm [thread:$0]  %s936, 512, %s934, [#allocation5], 256, 256, 16
    $region53: #{tpu_custom_call.1} parent=1 // pred_fallthru
      _
    // Predicated region
    $region54: #{tpu_custom_call.1} parent=1 // pred_check
      _
    $region55: #{tpu_custom_call.1} parent=1 // pred_check_branch
      %943 = sbr.rel (0) target = $region57
    $region56: #{tpu_custom_call.1} parent=1 // pred_region
      %944 = dma.done [#allocation5], 512
    $region57: #{tpu_custom_call.1} parent=1 // pred_fallthru
      _
    %945 = vsyncpa [#allocation4], 1
    %946 = vsyncpa [#allocation7], 1
    %947 = vsyncpa [#allocation10], 1
    %948 = vsyncpa [#allocation5], 1

</llo_original>
